<compile_context>
chip_gen: v6e
topology: v6e:2x2x1
jax: 0.10.0
libtpu: 0.0.40
codegen_flags: <defaults>
</compile_context>

<pallas_src>
import functools

import jax
import jax.numpy as jnp
import numpy as np
from jax.experimental import pallas as pl
from jax.experimental.pallas import tpu as pltpu

EPS = 1e-5
_VPU_AGG_MAX_N = 32   # below this, adj@x on the VPU (a (N,N)x(N,F) MXU call is mostly empty)


def _chip_info():
    """Return (vmem_bytes_per_core, n_tensorcores_per_chip) with safe fallbacks."""
    vmem = 128 * 1024 * 1024
    n_tc = 1
    kind = ""
    try:
        kind = jax.devices()[0].device_kind.lower()
    except Exception:
        pass
    try:
        info = pltpu.get_tpu_info()
        vmem = int(getattr(info, "vmem_capacity_bytes", vmem))
    except Exception:
        pass
    if "v7" in kind:                       # v7x: 2 TensorCores/chip, 64 MiB VMEM per core
        n_tc = 2
        vmem = min(vmem, 64 * 1024 * 1024)
    return vmem, n_tc


def _slc_kernel(x_ref, adj_ref, w_ref, b_ref, o_ref, *, use_vpu_agg, mxu_dtype):
    # x_ref:   (Bg, N, F)  node features for Bg graphs
    # adj_ref: (Bg, N, N)  dense adjacency for Bg graphs
    # w_ref:   (F, F)      Linear weight (shared across grid)
    # b_ref:   (1, F)      Linear bias   (shared across grid)
    x = x_ref[...].astype(jnp.float32)                 # (Bg, N, F)
    b = b_ref[...].astype(jnp.float32)                 # (1, F)
    bg, n, f = x.shape

    # --- sublayer: GCN-style aggregation agg[g,i,:] = sum_k adj[g,i,k] * x[g,k,:] ---
    if use_vpu_agg:
        # N << 128: a batched (N,N)@(N,F) matmul fills only N/256 of the MXU and pays
        # push/drain latency Bg times.  Unroll as N VPU multiply-adds on full vregs.
        adj = adj_ref[...].astype(jnp.float32)
        agg = adj[:, :, 0:1] * x[:, 0:1, :]
        for k in range(1, n):
            agg = agg + adj[:, :, k:k + 1] * x[:, k:k + 1, :]
    else:
        agg = jax.lax.dot_general(
            adj_ref[...].astype(mxu_dtype), x.astype(mxu_dtype),
            dimension_numbers=(((2,), (1,)), ((0,), (0,))),
            preferred_element_type=jnp.float32)        # (Bg, N, F)

    # --- linear projection (flattened to fill the MXU M dimension when legal) ------
    w = w_ref[...].astype(mxu_dtype)
    if n % 8 == 0:
        # (Bg*N, F) @ (F, F): reshape across a multiple-of-8 sublane dim is a free view.
        h = jnp.dot(agg.reshape(bg * n, f).astype(mxu_dtype), w,
                    preferred_element_type=jnp.float32)
        h = (h + b).reshape(bg, n, f)
    else:
        # avoid a layout-incompatible reshape: contract the last dim directly
        h = jax.lax.dot_general(agg.astype(mxu_dtype), w,
                                dimension_numbers=(((2,), (0,)), ((), ())),
                                preferred_element_type=jnp.float32)
        h = h + b.reshape(1, 1, f)

    # --- activation (ReLU, f32 on the VPU) + residual -------------------------------
    h = jnp.maximum(h, 0.0)
    y = x + h                                          # (Bg, N, F)

    # --- InstanceNorm (affine=False): single-pass fused reduction over nodes --------
    s1 = jnp.mean(y, axis=1, keepdims=True)            # E[y]        (Bg, 1, F)
    s2 = jnp.mean(y * y, axis=1, keepdims=True)        # E[y^2]
    var = jnp.maximum(s2 - s1 * s1, 0.0)               # biased var; clamp cancellation
    o_ref[...] = ((y - s1) * jax.lax.rsqrt(var + EPS)).astype(o_ref.dtype)


def sublayer_connection(x, adj, w, b, *, graphs_per_block=None, mxu_bf16=False):
    """x: [G, N, F], adj: [G, N, N], w: [F, F], b: [F] or [1, F] -> [G, N, F]."""
    G, N, F = x.shape
    assert adj.shape == (G, N, N)
    b2 = jnp.reshape(b, (1, F))

    x_elt = jnp.dtype(x.dtype).itemsize
    a_elt = jnp.dtype(adj.dtype).itemsize
    w_elt = jnp.dtype(w.dtype).itemsize

    vmem_bytes, n_tc = _chip_info()
    is_small_vmem = vmem_bytes <= 64 * 1024 * 1024          # v7x-class core
    budget = (40 if is_small_vmem else 88) * 1024 * 1024    # block budget (dbl-buffered)
    cap = (48 if is_small_vmem else 100) * 1024 * 1024      # scoped VMEM cap

    per_graph = 2 * N * F * x_elt + N * N * a_elt            # x + out + adj, per graph
    fixed = 2 * (F * F + F) * w_elt                          # w + b (worst case buffered)

    # ----- graphs per grid step --------------------------------------------------
    if graphs_per_block is None:
        bg_vmem = max(1, (budget - fixed) // (2 * per_graph))
        # stop growing Bg once the flattened matmul has >=256 rows AND the x block
        # is >= ~512 KiB (measured ~85% of HBM roofline there)
        rows_target, bytes_target = 256, 512 * 1024
        bg_perf = max(-(-rows_target // max(N, 1)),
                      -(-bytes_target // max(N * F * x_elt, 1)))
        bg_max = int(max(1, min(G, bg_vmem, bg_perf)))
        if n_tc >= 2:
            # v7x megacore only: keep >=2 grid steps per TensorCore when G allows
            if G >= 4:
                bg_max = min(bg_max, max(1, G // 4))
            elif G >= 2:
                bg_max = min(bg_max, max(1, G // 2))
    else:
        bg_max = max(1, min(G, int(graphs_per_block)))

    num_blocks = -(-G // bg_max)
    Bg = -(-G // num_blocks)          # minimal Bg for that block count (no padding when
    Gp = Bg * num_blocks              # num_blocks divides G)

    # ----- graph-axis padding only when unavoidable -------------------------------
    if Gp != G:
        xp = jnp.zeros((Gp, N, F), x.dtype).at[:G].set(x)
        adjp = jnp.zeros((Gp, N, N), adj.dtype).at[:G].set(adj)
    else:
        xp, adjp = x, adj

    # ----- VMEM budget / cost estimate ---------------------------------------------
    block_bytes = 2 * Bg * per_graph + fixed
    vmem_limit = int(min(cap, max(32 * 1024 * 1024, block_bytes + 8 * 1024 * 1024)))

    cost = pl.CostEstimate(
        flops=2 * Gp * (N * N * F + N * F * F),
        transcendentals=Gp * F,
        bytes_accessed=(2 * Gp * N * F * x_elt + Gp * N * N * a_elt
                        + (F * F + F) * w_elt),
    )

    mxu_dtype = jnp.bfloat16 if mxu_bf16 else jnp.float32
    use_vpu_agg = N <= _VPU_AGG_MAX_N

    # w/b index_map is constant: no point double-buffering the weight once it is big
    wb_pipe = {"pipeline_mode": pl.Buffered(1)} if F >= 512 else {}

    kernel = functools.partial(_slc_kernel, use_vpu_agg=use_vpu_agg, mxu_dtype=mxu_dtype)

    out = pl.pallas_call(
        kernel,
        out_shape=jax.ShapeDtypeStruct((Gp, N, F), x.dtype),
        grid_spec=pltpu.PrefetchScalarGridSpec(
            num_scalar_prefetch=0,
            grid=(num_blocks,),
            in_specs=[
                pl.BlockSpec((Bg, N, F), lambda g: (g, 0, 0)),
                pl.BlockSpec((Bg, N, N), lambda g: (g, 0, 0)),
                pl.BlockSpec((F, F), lambda g: (0, 0), **wb_pipe),
                pl.BlockSpec((1, F), lambda g: (0, 0), **wb_pipe),
            ],
            out_specs=pl.BlockSpec((Bg, N, F), lambda g: (g, 0, 0)),
        ),
        compiler_params=pltpu.CompilerParams(
            dimension_semantics=("parallel",),
            vmem_limit_bytes=vmem_limit),
        cost_estimate=cost,
    )(xp, adjp, w, b2)

    return out if Gp == G else out[:G]


# --------------------------------------------------------------------------------------
# Reference + test harness
# --------------------------------------------------------------------------------------
def _reference(x, adj, w, b):
    x = x.astype(jnp.float32)
    h = jnp.einsum("gnm,gmf->gnf", adj.astype(jnp.float32), x)
    h = jnp.einsum("gnf,fk->gnk", h, w.astype(jnp.float32)) + jnp.reshape(b, (1, 1, -1))
    h = jnp.maximum(h, 0.0)
    y = x + h
    mean = jnp.mean(y, axis=1, keepdims=True)
    c = y - mean
    var = jnp.mean(c * c, axis=1, keepdims=True)
    return c / jnp.sqrt(var + EPS)


def _make_inputs(key, G, N, F):
    kx, ka, kw, kb = jax.random.split(key, 4)
    x = jax.random.normal(kx, (G, N, F), dtype=jnp.float32)
    a = (jax.random.uniform(ka, (G, N, N)) > 0.6).astype(jnp.float32)
    a = jnp.maximum(a, jnp.transpose(a, (0, 2, 1)))
    a = jnp.maximum(a, jnp.eye(N, dtype=jnp.float32)[None])
    adj = a / jnp.sum(a, axis=-1, keepdims=True)
    bound = 1.0 / np.sqrt(F)
    w = jax.random.uniform(kw, (F, F), minval=-bound, maxval=bound, dtype=jnp.float32)
    b = jax.random.uniform(kb, (1, F), minval=-bound, maxval=bound, dtype=jnp.float32)
    return x, adj, w, b


if __name__ == "__main__":
    key = jax.random.PRNGKey(0)

    # Case 1: the toy shape from the spec. No padding, single grid step on 1-TC chips.
    G, N, F = 2, 16, 32
    x, adj, w, b = _make_inputs(key, G, N, F)
    batch = jnp.repeat(jnp.arange(G), N)   # implied PyG batch vector (documentation only)
    out = jax.block_until_ready(sublayer_connection(x, adj, w, b))
    ref = _reference(x, adj, w, b)
    np.testing.assert_allclose(np.asarray(out), np.asarray(ref), rtol=1e-4, atol=1e-4)

    # Case 2: odd graph count with a forced block size -> exercises graph-axis padding
    # (G=5, Bg=2 -> Gp=6, 3 grid steps) and the padded-graph safe path.
    x2, adj2, w2, b2 = _make_inputs(jax.random.PRNGKey(1), 5, N, F)
    out2 = jax.block_until_ready(sublayer_connection(x2, adj2, w2, b2, graphs_per_block=2))
    ref2 = _reference(x2, adj2, w2, b2)
    np.testing.assert_allclose(np.asarray(out2), np.asarray(ref2), rtol=1e-4, atol=1e-4)

    # Case 3: bf16 MXU operands (the v6e/v7x throughput path); looser tolerance.
    x3, adj3, w3, b3 = _make_inputs(jax.random.PRNGKey(2), 4, N, F)
    out3 = jax.block_until_ready(sublayer_connection(x3, adj3, w3, b3, mxu_bf16=True))
    ref3 = _reference(x3, adj3, w3, b3)
    np.testing.assert_allclose(np.asarray(out3), np.asarray(ref3), rtol=2e-2, atol=2e-2)

    # Case 4: larger graphs (N=128) -> batched MXU aggregation + flattened projection.
    x4, adj4, w4, b4 = _make_inputs(jax.random.PRNGKey(3), 3, 128, 64)
    out4 = jax.block_until_ready(sublayer_connection(x4, adj4, w4, b4))
    ref4 = _reference(x4, adj4, w4, b4)
    np.testing.assert_allclose(np.asarray(out4), np.asarray(ref4), rtol=1e-4, atol=1e-4)

    print("KERNEL_OK")
</pallas_src>

<mosaic_0001>
module attributes {stable_mosaic.version = 11 : i64} {
  func.func @_slc_kernel(%arg0: i32, %arg1: memref<2x16x32xf32, #tpu.memory_space<vmem>>, %arg2: memref<2x16x16xf32, #tpu.memory_space<vmem>>, %arg3: memref<32x32xf32, #tpu.memory_space<vmem>>, %arg4: memref<1x32xf32, #tpu.memory_space<vmem>>, %arg5: memref<2x16x32xf32, #tpu.memory_space<vmem>>) attributes {dimension_semantics = [#tpu.dimension_semantics<parallel>], iteration_bounds = array<i64: 1>, scalar_prefetch = 0 : i64, scratch_operands = 0 : i64, tpu.core_type = #tpu.core_type<tc>, window_params = [{transform_indices = @transform_0, window_bounds = array<i64: 2, 16, 32>}, {transform_indices = @transform_1, window_bounds = array<i64: 2, 16, 16>}, {pipeline_mode = #tpu.pipeline_mode<synchronous>, transform_indices = @transform_2, window_bounds = array<i64: 32, 32>}, {pipeline_mode = #tpu.pipeline_mode<synchronous>, transform_indices = @transform_3, window_bounds = array<i64: 1, 32>}, {transform_indices = @transform_4, window_bounds = array<i64: 2, 16, 32>}]} {
    %c0 = arith.constant 0 : index
    %c0_0 = arith.constant 0 : index
    %c0_1 = arith.constant 0 : index
    %0 = vector.load %arg1[%c0, %c0_0, %c0_1] : memref<2x16x32xf32, #tpu.memory_space<vmem>>, vector<2x16x32xf32>
    %c0_2 = arith.constant 0 : index
    %c0_3 = arith.constant 0 : index
    %1 = vector.load %arg4[%c0_2, %c0_3] : memref<1x32xf32, #tpu.memory_space<vmem>>, vector<1x32xf32>
    %c0_4 = arith.constant 0 : index
    %c0_5 = arith.constant 0 : index
    %c0_6 = arith.constant 0 : index
    %2 = vector.load %arg2[%c0_4, %c0_5, %c0_6] : memref<2x16x16xf32, #tpu.memory_space<vmem>>, vector<2x16x16xf32>
    %3 = vector.extract_strided_slice %2 {offsets = [0, 0, 0], sizes = [2, 16, 1], strides = [1, 1, 1]} : vector<2x16x16xf32> to vector<2x16x1xf32>
    %4 = vector.extract_strided_slice %0 {offsets = [0, 0, 0], sizes = [2, 1, 32], strides = [1, 1, 1]} : vector<2x16x32xf32> to vector<2x1x32xf32>
    %5 = vector.broadcast %3 : vector<2x16x1xf32> to vector<2x16x32xf32>
    %6 = vector.broadcast %4 : vector<2x1x32xf32> to vector<2x16x32xf32>
    %7 = arith.mulf %5, %6 : vector<2x16x32xf32>
    %8 = vector.extract_strided_slice %2 {offsets = [0, 0, 1], sizes = [2, 16, 1], strides = [1, 1, 1]} : vector<2x16x16xf32> to vector<2x16x1xf32>
    %9 = vector.extract_strided_slice %0 {offsets = [0, 1, 0], sizes = [2, 1, 32], strides = [1, 1, 1]} : vector<2x16x32xf32> to vector<2x1x32xf32>
    %10 = vector.broadcast %8 : vector<2x16x1xf32> to vector<2x16x32xf32>
    %11 = vector.broadcast %9 : vector<2x1x32xf32> to vector<2x16x32xf32>
    %12 = arith.mulf %10, %11 : vector<2x16x32xf32>
    %13 = arith.addf %7, %12 : vector<2x16x32xf32>
    %14 = vector.extract_strided_slice %2 {offsets = [0, 0, 2], sizes = [2, 16, 1], strides = [1, 1, 1]} : vector<2x16x16xf32> to vector<2x16x1xf32>
    %15 = vector.extract_strided_slice %0 {offsets = [0, 2, 0], sizes = [2, 1, 32], strides = [1, 1, 1]} : vector<2x16x32xf32> to vector<2x1x32xf32>
    %16 = vector.broadcast %14 : vector<2x16x1xf32> to vector<2x16x32xf32>
    %17 = vector.broadcast %15 : vector<2x1x32xf32> to vector<2x16x32xf32>
    %18 = arith.mulf %16, %17 : vector<2x16x32xf32>
    %19 = arith.addf %13, %18 : vector<2x16x32xf32>
    %20 = vector.extract_strided_slice %2 {offsets = [0, 0, 3], sizes = [2, 16, 1], strides = [1, 1, 1]} : vector<2x16x16xf32> to vector<2x16x1xf32>
    %21 = vector.extract_strided_slice %0 {offsets = [0, 3, 0], sizes = [2, 1, 32], strides = [1, 1, 1]} : vector<2x16x32xf32> to vector<2x1x32xf32>
    %22 = vector.broadcast %20 : vector<2x16x1xf32> to vector<2x16x32xf32>
    %23 = vector.broadcast %21 : vector<2x1x32xf32> to vector<2x16x32xf32>
    %24 = arith.mulf %22, %23 : vector<2x16x32xf32>
    %25 = arith.addf %19, %24 : vector<2x16x32xf32>
    %26 = vector.extract_strided_slice %2 {offsets = [0, 0, 4], sizes = [2, 16, 1], strides = [1, 1, 1]} : vector<2x16x16xf32> to vector<2x16x1xf32>
    %27 = vector.extract_strided_slice %0 {offsets = [0, 4, 0], sizes = [2, 1, 32], strides = [1, 1, 1]} : vector<2x16x32xf32> to vector<2x1x32xf32>
    %28 = vector.broadcast %26 : vector<2x16x1xf32> to vector<2x16x32xf32>
    %29 = vector.broadcast %27 : vector<2x1x32xf32> to vector<2x16x32xf32>
    %30 = arith.mulf %28, %29 : vector<2x16x32xf32>
    %31 = arith.addf %25, %30 : vector<2x16x32xf32>
    %32 = vector.extract_strided_slice %2 {offsets = [0, 0, 5], sizes = [2, 16, 1], strides = [1, 1, 1]} : vector<2x16x16xf32> to vector<2x16x1xf32>
    %33 = vector.extract_strided_slice %0 {offsets = [0, 5, 0], sizes = [2, 1, 32], strides = [1, 1, 1]} : vector<2x16x32xf32> to vector<2x1x32xf32>
    %34 = vector.broadcast %32 : vector<2x16x1xf32> to vector<2x16x32xf32>
    %35 = vector.broadcast %33 : vector<2x1x32xf32> to vector<2x16x32xf32>
    %36 = arith.mulf %34, %35 : vector<2x16x32xf32>
    %37 = arith.addf %31, %36 : vector<2x16x32xf32>
    %38 = vector.extract_strided_slice %2 {offsets = [0, 0, 6], sizes = [2, 16, 1], strides = [1, 1, 1]} : vector<2x16x16xf32> to vector<2x16x1xf32>
    %39 = vector.extract_strided_slice %0 {offsets = [0, 6, 0], sizes = [2, 1, 32], strides = [1, 1, 1]} : vector<2x16x32xf32> to vector<2x1x32xf32>
    %40 = vector.broadcast %38 : vector<2x16x1xf32> to vector<2x16x32xf32>
    %41 = vector.broadcast %39 : vector<2x1x32xf32> to vector<2x16x32xf32>
    %42 = arith.mulf %40, %41 : vector<2x16x32xf32>
    %43 = arith.addf %37, %42 : vector<2x16x32xf32>
    %44 = vector.extract_strided_slice %2 {offsets = [0, 0, 7], sizes = [2, 16, 1], strides = [1, 1, 1]} : vector<2x16x16xf32> to vector<2x16x1xf32>
    %45 = vector.extract_strided_slice %0 {offsets = [0, 7, 0], sizes = [2, 1, 32], strides = [1, 1, 1]} : vector<2x16x32xf32> to vector<2x1x32xf32>
    %46 = vector.broadcast %44 : vector<2x16x1xf32> to vector<2x16x32xf32>
    %47 = vector.broadcast %45 : vector<2x1x32xf32> to vector<2x16x32xf32>
    %48 = arith.mulf %46, %47 : vector<2x16x32xf32>
    %49 = arith.addf %43, %48 : vector<2x16x32xf32>
    %50 = vector.extract_strided_slice %2 {offsets = [0, 0, 8], sizes = [2, 16, 1], strides = [1, 1, 1]} : vector<2x16x16xf32> to vector<2x16x1xf32>
    %51 = vector.extract_strided_slice %0 {offsets = [0, 8, 0], sizes = [2, 1, 32], strides = [1, 1, 1]} : vector<2x16x32xf32> to vector<2x1x32xf32>
    %52 = vector.broadcast %50 : vector<2x16x1xf32> to vector<2x16x32xf32>
    %53 = vector.broadcast %51 : vector<2x1x32xf32> to vector<2x16x32xf32>
    %54 = arith.mulf %52, %53 : vector<2x16x32xf32>
    %55 = arith.addf %49, %54 : vector<2x16x32xf32>
    %56 = vector.extract_strided_slice %2 {offsets = [0, 0, 9], sizes = [2, 16, 1], strides = [1, 1, 1]} : vector<2x16x16xf32> to vector<2x16x1xf32>
    %57 = vector.extract_strided_slice %0 {offsets = [0, 9, 0], sizes = [2, 1, 32], strides = [1, 1, 1]} : vector<2x16x32xf32> to vector<2x1x32xf32>
    %58 = vector.broadcast %56 : vector<2x16x1xf32> to vector<2x16x32xf32>
    %59 = vector.broadcast %57 : vector<2x1x32xf32> to vector<2x16x32xf32>
    %60 = arith.mulf %58, %59 : vector<2x16x32xf32>
    %61 = arith.addf %55, %60 : vector<2x16x32xf32>
    %62 = vector.extract_strided_slice %2 {offsets = [0, 0, 10], sizes = [2, 16, 1], strides = [1, 1, 1]} : vector<2x16x16xf32> to vector<2x16x1xf32>
    %63 = vector.extract_strided_slice %0 {offsets = [0, 10, 0], sizes = [2, 1, 32], strides = [1, 1, 1]} : vector<2x16x32xf32> to vector<2x1x32xf32>
    %64 = vector.broadcast %62 : vector<2x16x1xf32> to vector<2x16x32xf32>
    %65 = vector.broadcast %63 : vector<2x1x32xf32> to vector<2x16x32xf32>
    %66 = arith.mulf %64, %65 : vector<2x16x32xf32>
    %67 = arith.addf %61, %66 : vector<2x16x32xf32>
    %68 = vector.extract_strided_slice %2 {offsets = [0, 0, 11], sizes = [2, 16, 1], strides = [1, 1, 1]} : vector<2x16x16xf32> to vector<2x16x1xf32>
    %69 = vector.extract_strided_slice %0 {offsets = [0, 11, 0], sizes = [2, 1, 32], strides = [1, 1, 1]} : vector<2x16x32xf32> to vector<2x1x32xf32>
    %70 = vector.broadcast %68 : vector<2x16x1xf32> to vector<2x16x32xf32>
    %71 = vector.broadcast %69 : vector<2x1x32xf32> to vector<2x16x32xf32>
    %72 = arith.mulf %70, %71 : vector<2x16x32xf32>
    %73 = arith.addf %67, %72 : vector<2x16x32xf32>
    %74 = vector.extract_strided_slice %2 {offsets = [0, 0, 12], sizes = [2, 16, 1], strides = [1, 1, 1]} : vector<2x16x16xf32> to vector<2x16x1xf32>
    %75 = vector.extract_strided_slice %0 {offsets = [0, 12, 0], sizes = [2, 1, 32], strides = [1, 1, 1]} : vector<2x16x32xf32> to vector<2x1x32xf32>
    %76 = vector.broadcast %74 : vector<2x16x1xf32> to vector<2x16x32xf32>
    %77 = vector.broadcast %75 : vector<2x1x32xf32> to vector<2x16x32xf32>
    %78 = arith.mulf %76, %77 : vector<2x16x32xf32>
    %79 = arith.addf %73, %78 : vector<2x16x32xf32>
    %80 = vector.extract_strided_slice %2 {offsets = [0, 0, 13], sizes = [2, 16, 1], strides = [1, 1, 1]} : vector<2x16x16xf32> to vector<2x16x1xf32>
    %81 = vector.extract_strided_slice %0 {offsets = [0, 13, 0], sizes = [2, 1, 32], strides = [1, 1, 1]} : vector<2x16x32xf32> to vector<2x1x32xf32>
    %82 = vector.broadcast %80 : vector<2x16x1xf32> to vector<2x16x32xf32>
    %83 = vector.broadcast %81 : vector<2x1x32xf32> to vector<2x16x32xf32>
    %84 = arith.mulf %82, %83 : vector<2x16x32xf32>
    %85 = arith.addf %79, %84 : vector<2x16x32xf32>
    %86 = vector.extract_strided_slice %2 {offsets = [0, 0, 14], sizes = [2, 16, 1], strides = [1, 1, 1]} : vector<2x16x16xf32> to vector<2x16x1xf32>
    %87 = vector.extract_strided_slice %0 {offsets = [0, 14, 0], sizes = [2, 1, 32], strides = [1, 1, 1]} : vector<2x16x32xf32> to vector<2x1x32xf32>
    %88 = vector.broadcast %86 : vector<2x16x1xf32> to vector<2x16x32xf32>
    %89 = vector.broadcast %87 : vector<2x1x32xf32> to vector<2x16x32xf32>
    %90 = arith.mulf %88, %89 : vector<2x16x32xf32>
    %91 = arith.addf %85, %90 : vector<2x16x32xf32>
    %92 = vector.extract_strided_slice %2 {offsets = [0, 0, 15], sizes = [2, 16, 1], strides = [1, 1, 1]} : vector<2x16x16xf32> to vector<2x16x1xf32>
    %93 = vector.extract_strided_slice %0 {offsets = [0, 15, 0], sizes = [2, 1, 32], strides = [1, 1, 1]} : vector<2x16x32xf32> to vector<2x1x32xf32>
    %94 = vector.broadcast %92 : vector<2x16x1xf32> to vector<2x16x32xf32>
    %95 = vector.broadcast %93 : vector<2x1x32xf32> to vector<2x16x32xf32>
    %96 = arith.mulf %94, %95 : vector<2x16x32xf32>
    %97 = arith.addf %91, %96 : vector<2x16x32xf32>
    %c0_7 = arith.constant 0 : index
    %c0_8 = arith.constant 0 : index
    %98 = vector.load %arg3[%c0_7, %c0_8] : memref<32x32xf32, #tpu.memory_space<vmem>>, vector<32x32xf32>
    %99 = vector.shape_cast %97 : vector<2x16x32xf32> to vector<32x32xf32>
    %cst = arith.constant dense<0.000000e+00> : vector<32x32xf32>
    %100 = tpu.matmul %99, %98, %cst {dimension_numbers = #tpu.dot_dimension_numbers<[1], [0], [0], [1], [0, 0, 1, 1], [], []>} : vector<32x32xf32>, vector<32x32xf32>, vector<32x32xf32> -> vector<32x32xf32>
    %101 = vector.broadcast %1 : vector<1x32xf32> to vector<32x32xf32>
    %102 = arith.addf %100, %101 : vector<32x32xf32>
    %103 = vector.shape_cast %102 : vector<32x32xf32> to vector<2x16x32xf32>
    %cst_9 = arith.constant 0.000000e+00 : f32
    %104 = vector.broadcast %cst_9 : f32 to vector<2x16x32xf32>
    %105 = arith.maximumf %103, %104 : vector<2x16x32xf32>
    %106 = arith.addf %0, %105 : vector<2x16x32xf32>
    %cst_10 = arith.constant dense<0.000000e+00> : vector<2x32xf32>
    %107 = vector.multi_reduction <add>, %106, %cst_10 [1] : vector<2x16x32xf32> to vector<2x32xf32>
    %108 = vector.shape_cast %107 : vector<2x32xf32> to vector<2x1x32xf32>
    %cst_11 = arith.constant 1.600000e+01 : f32
    %109 = vector.broadcast %cst_11 : f32 to vector<2x1x32xf32>
    %110 = arith.divf %108, %109 : vector<2x1x32xf32>
    %111 = arith.mulf %106, %106 : vector<2x16x32xf32>
    %cst_12 = arith.constant dense<0.000000e+00> : vector<2x32xf32>
    %112 = vector.multi_reduction <add>, %111, %cst_12 [1] : vector<2x16x32xf32> to vector<2x32xf32>
    %113 = vector.shape_cast %112 : vector<2x32xf32> to vector<2x1x32xf32>
    %cst_13 = arith.constant 1.600000e+01 : f32
    %114 = vector.broadcast %cst_13 : f32 to vector<2x1x32xf32>
    %115 = arith.divf %113, %114 : vector<2x1x32xf32>
    %116 = arith.mulf %110, %110 : vector<2x1x32xf32>
    %117 = arith.subf %115, %116 : vector<2x1x32xf32>
    %cst_14 = arith.constant 0.000000e+00 : f32
    %118 = vector.broadcast %cst_14 : f32 to vector<2x1x32xf32>
    %119 = arith.maximumf %117, %118 : vector<2x1x32xf32>
    %120 = vector.broadcast %110 : vector<2x1x32xf32> to vector<2x16x32xf32>
    %121 = arith.subf %106, %120 : vector<2x16x32xf32>
    %cst_15 = arith.constant 9.99999974E-6 : f32
    %122 = vector.broadcast %cst_15 : f32 to vector<2x1x32xf32>
    %123 = arith.addf %119, %122 : vector<2x1x32xf32>
    %124 = math.rsqrt %123 : vector<2x1x32xf32>
    %125 = vector.broadcast %124 : vector<2x1x32xf32> to vector<2x16x32xf32>
    %126 = arith.mulf %121, %125 : vector<2x16x32xf32>
    %c0_16 = arith.constant 0 : index
    %c0_17 = arith.constant 0 : index
    %c0_18 = arith.constant 0 : index
    %127 = vector.load %arg5[%c0_16, %c0_17, %c0_18] : memref<2x16x32xf32, #tpu.memory_space<vmem>>, vector<2x16x32xf32>
    tpu.vector_store %arg5[%c0_16, %c0_17, %c0_18], %126 {strides = array<i32>} : memref<2x16x32xf32, #tpu.memory_space<vmem>>, vector<2x16x32xf32>,
    return
  }
  func.func @transform_0(%arg0: i32) -> (i32, i32, i32) {
    %c0_i32 = arith.constant 0 : i32
    %c0_i32_0 = arith.constant 0 : i32
    %c0_i32_1 = arith.constant 0 : i32
    return %arg0, %c0_i32, %c0_i32_0 : i32, i32, i32
  }
  func.func @transform_1(%arg0: i32) -> (i32, i32, i32) {
    %c0_i32 = arith.constant 0 : i32
    %c0_i32_0 = arith.constant 0 : i32
    %c0_i32_1 = arith.constant 0 : i32
    return %arg0, %c0_i32, %c0_i32_0 : i32, i32, i32
  }
  func.func @transform_2(%arg0: i32) -> (i32, i32) {
    %c0_i32 = arith.constant 0 : i32
    %c0_i32_0 = arith.constant 0 : i32
    %c0_i32_1 = arith.constant 0 : i32
    return %c0_i32, %c0_i32_0 : i32, i32
  }
  func.func @transform_3(%arg0: i32) -> (i32, i32) {
    %c0_i32 = arith.constant 0 : i32
    %c0_i32_0 = arith.constant 0 : i32
    %c0_i32_1 = arith.constant 0 : i32
    return %c0_i32, %c0_i32_0 : i32, i32
  }
  func.func @transform_4(%arg0: i32) -> (i32, i32, i32) {
    %c0_i32 = arith.constant 0 : i32
    %c0_i32_0 = arith.constant 0 : i32
    %c0_i32_1 = arith.constant 0 : i32
    return %arg0, %c0_i32, %c0_i32_0 : i32, i32, i32
  }
}

</mosaic_0001>

<llo_original>
// kernel: tpu_custom_call.1
$region0: #{tpu_custom_call.1}
  #allocation0 [shape = 'u32[]', space=smem, size = 0x4, offset = 0x4, fixed_abs, tag = 'smem constant byte address 0x4 - core index']
  #allocation1 [shape = 'u32[144,128]{1,0:T(1,128)}', space=vmem, size = 0x12000, scoped, tag = 'internal scratch']
  %s0 = inlined_call_operand.hbm [shape: f32[2,16,32], index: 0, kind: input, shape index: {}]
  %s1 = inlined_call_operand.hbm [shape: f32[2,16,16], index: 1, kind: input, shape index: {}]
  %s2 = inlined_call_operand.hbm [shape: f32[32,32], index: 2, kind: input, shape index: {}]
  %s3 = inlined_call_operand.vmem [shape: f32[1,32], index: 3, kind: input, shape index: {}]
  %s4 = inlined_call_operand.hbm [shape: f32[2,16,32], index: 4, kind: output, shape index: {}]
  %s5 = sld [smem:[#allocation0]]
  $region38: #{tpu_custom_call.1} parent=0
    _
  %s7 = ssub.s32 1, %s5
  %s8 = scalar_select 0, %s7, %s5
  $region1: #{tpu_custom_call.1} parent=0
    #allocation2 [shape = 'u8[16384]{0}', space=vmem, size = 0x4000, scoped, tag = 'input window, operand 0, single buffered']
    #allocation3 [shape = 's32[1]{0}', space=sflag, size = 0x4, scoped, tag = 'scoped memory for tpu_custom_call.1']
    #allocation4 [shape = 's32[1]{0}', space=sflag, size = 0x4, scoped, tag = 'scoped memory for tpu_custom_call.1']
    #allocation5 [shape = 'u8[16384]{0}', space=vmem, size = 0x4000, scoped, tag = 'input window, operand 1, single buffered']
    #allocation6 [shape = 's32[1]{0}', space=sflag, size = 0x4, scoped, tag = 'scoped memory for tpu_custom_call.1']
    #allocation7 [shape = 'u8[16384]{0}', space=vmem, size = 0x4000, scoped, tag = 'input window, operand 2, single buffered']
    #allocation8 [shape = 'u8[16384]{0}', space=vmem, size = 0x4000, scoped, tag = 'output window, operand 0, single buffered']
    %9 = vsyncpa [#allocation3], 0
    %10 = vsyncpa [#allocation6], 0
    %11 = vsyncpa [#allocation4], 0
    // Predicated region
    $region2: #{tpu_custom_call.1} parent=1 // pred_check
      _
    $region3: #{tpu_custom_call.1} parent=1 // pred_check_branch
      %13 = sbr.rel (0) target = $region5
    $region4: #{tpu_custom_call.1} parent=1 // pred_region
      %s15 = ssub.s32 512, 512
      %16 = vsyncadd [#allocation3], %s15
      %s17 = sshll.u32 [#allocation2], 4
      %s18 = int_to_ptr.vmem [resolvable:$true] %s17
      %23 = dma.hbm_to_vmem [thread:$0]  %s0, 512, %s18, [#allocation3], 128, 128, 8
    $region5: #{tpu_custom_call.1} parent=1 // pred_fallthru
      _
    // Predicated region
    $region6: #{tpu_custom_call.1} parent=1 // pred_check
      _
    $region7: #{tpu_custom_call.1} parent=1 // pred_check_branch
      %25 = sbr.rel (0) target = $region9
    $region8: #{tpu_custom_call.1} parent=1 // pred_region
      %s27 = ssub.s32 512, 512
      %28 = vsyncadd [#allocation6], %s27
      %s29 = sshll.u32 [#allocation5], 4
      %s30 = int_to_ptr.vmem [resolvable:$true] %s29
      %35 = dma.hbm_to_vmem [thread:$0]  %s1, 512, %s30, [#allocation6], 128, 128, 8
    $region9: #{tpu_custom_call.1} parent=1 // pred_fallthru
      _
    // Predicated region
    $region10: #{tpu_custom_call.1} parent=1 // pred_check
      _
    $region11: #{tpu_custom_call.1} parent=1 // pred_check_branch
      %37 = sbr.rel (0) target = $region13
    $region12: #{tpu_custom_call.1} parent=1 // pred_region
      %s39 = ssub.s32 512, 512
      %40 = vsyncadd [#allocation6], %s39
      %s41 = sshll.u32 [#allocation7], 4
      %s42 = int_to_ptr.vmem [resolvable:$true] %s41
      %47 = dma.hbm_to_vmem [thread:$0]  %s2, 512, %s42, [#allocation6], 128, 128, 8
    $region13: #{tpu_custom_call.1} parent=1 // pred_fallthru
      _
    // Predicated region
    $region14: #{tpu_custom_call.1} parent=1 // pred_check
      _
    $region15: #{tpu_custom_call.1} parent=1 // pred_check_branch
      %49 = sbr.rel (0) target = $region17
    $region16: #{tpu_custom_call.1} parent=1 // pred_region
      _
    $region17: #{tpu_custom_call.1} parent=1 // pred_fallthru
      _
    // Predicated region
    $region18: #{tpu_custom_call.1} parent=1 // pred_check
      _
    $region19: #{tpu_custom_call.1} parent=1 // pred_check_branch
      %51 = sbr.rel (0) target = $region21
    $region20: #{tpu_custom_call.1} parent=1 // pred_region
      %52 = dma.done [#allocation3], 512
    $region21: #{tpu_custom_call.1} parent=1 // pred_fallthru
      _
    // Predicated region
    $region22: #{tpu_custom_call.1} parent=1 // pred_check
      _
    $region23: #{tpu_custom_call.1} parent=1 // pred_check_branch
      %54 = sbr.rel (0) target = $region25
    $region24: #{tpu_custom_call.1} parent=1 // pred_region
      %55 = dma.done [#allocation6], 512
    $region25: #{tpu_custom_call.1} parent=1 // pred_fallthru
      _
    // Predicated region
    $region26: #{tpu_custom_call.1} parent=1 // pred_check
      _
    $region27: #{tpu_custom_call.1} parent=1 // pred_check_branch
      %57 = sbr.rel (0) target = $region29
    $region28: #{tpu_custom_call.1} parent=1 // pred_region
      %58 = dma.done [#allocation6], 512
    $region29: #{tpu_custom_call.1} parent=1 // pred_fallthru
      _
    %v59 = vld [vmem:[#allocation2] sm:$0xff]
    %v60 = vld [vmem:[#allocation2 + $0x8] sm:$0xff]
    %v61 = vld [vmem:[#allocation2 + $0x10] sm:$0xff]
    %v62 = vld [vmem:[#allocation2 + $0x18] sm:$0xff]
    %v63 = vld [vmem:[%s3] sm:$0x1]
    %v64 = vld [vmem:[#allocation5] sm:$0xff]
    %v65 = vld [vmem:[#allocation5 + $0x8] sm:$0xff]
    %v66 = vld [vmem:[#allocation5 + $0x10] sm:$0xff]
    %v67 = vld [vmem:[#allocation5 + $0x18] sm:$0xff]
    %69 = vset.pattern.permute.xlu0 0
    %70 = vperm.xlu0 %69, %v64
    %v71 = vpop.permute.xlu0 %70
    %74 = vset.pattern.permute.xlu0 0
    %75 = vperm.xlu0 %74, %v65
    %v76 = vpop.permute.xlu0 %75
    %79 = vset.pattern.permute.xlu0 0
    %80 = vperm.xlu0 %79, %v66
    %v81 = vpop.permute.xlu0 %80
    %84 = vset.pattern.permute.xlu0 0
    %85 = vperm.xlu0 %84, %v67
    %v86 = vpop.permute.xlu0 %85
    %v88 = vlaneseq
    %v89 = vshrl.u32 %v88, 7
    %v90 = vsub.s32 0, %v89
    %v91 = vrot.slane %v59, %v90
    %v92 = vlaneseq
    %v93 = vshrl.u32 %v92, 7
    %v94 = vsub.s32 0, %v93
    %v95 = vrot.slane %v61, %v94
    %v96 = vmul.f32 %v71, %v91
    %v97 = vmul.f32 %v76, %v91
    %v98 = vmul.f32 %v81, %v95
    %v99 = vmul.f32 %v86, %v95
    %100 = vset.pattern.permute.xlu0 1
    %101 = vperm.xlu0 %100, %v64
    %v102 = vpop.permute.xlu0 %101
    %104 = vset.pattern.permute.xlu0 1
    %105 = vperm.xlu0 %104, %v65
    %v106 = vpop.permute.xlu0 %105
    %108 = vset.pattern.permute.xlu0 1
    %109 = vperm.xlu0 %108, %v66
    %v110 = vpop.permute.xlu0 %109
    %112 = vset.pattern.permute.xlu0 1
    %113 = vperm.xlu0 %112, %v67
    %v114 = vpop.permute.xlu0 %113
    %v116 = vlaneseq
    %v117 = vshrl.u32 %v116, 7
    %v118 = vsub.s32 1, %v117
    %v119 = vrot.slane %v59, %v118
    %v120 = vlaneseq
    %v121 = vshrl.u32 %v120, 7
    %v122 = vsub.s32 1, %v121
    %v123 = vrot.slane %v61, %v122
    %v124 = vmul.f32 %v102, %v119
    %v125 = vmul.f32 %v106, %v119
    %v126 = vmul.f32 %v110, %v123
    %v127 = vmul.f32 %v114, %v123
    %v128 = vadd.f32 %v96, %v124
    %v129 = vadd.f32 %v97, %v125
    %v130 = vadd.f32 %v98, %v126
    %v131 = vadd.f32 %v99, %v127
    %132 = vset.pattern.permute.xlu0 2
    %133 = vperm.xlu0 %132, %v64
    %v134 = vpop.permute.xlu0 %133
    %136 = vset.pattern.permute.xlu0 2
    %137 = vperm.xlu0 %136, %v65
    %v138 = vpop.permute.xlu0 %137
    %140 = vset.pattern.permute.xlu0 2
    %141 = vperm.xlu0 %140, %v66
    %v142 = vpop.permute.xlu0 %141
    %144 = vset.pattern.permute.xlu0 2
    %145 = vperm.xlu0 %144, %v67
    %v146 = vpop.permute.xlu0 %145
    %v148 = vlaneseq
    %v149 = vshrl.u32 %v148, 7
    %v150 = vsub.s32 2, %v149
    %v151 = vrot.slane %v59, %v150
    %v152 = vlaneseq
    %v153 = vshrl.u32 %v152, 7
    %v154 = vsub.s32 2, %v153
    %v155 = vrot.slane %v61, %v154
    %v156 = vmul.f32 %v134, %v151
    %v157 = vmul.f32 %v138, %v151
    %v158 = vmul.f32 %v142, %v155
    %v159 = vmul.f32 %v146, %v155
    %v160 = vadd.f32 %v128, %v156
    %v161 = vadd.f32 %v129, %v157
    %v162 = vadd.f32 %v130, %v158
    %v163 = vadd.f32 %v131, %v159
    %164 = vset.pattern.permute.xlu0 3
    %165 = vperm.xlu0 %164, %v64
    %v166 = vpop.permute.xlu0 %165
    %168 = vset.pattern.permute.xlu0 3
    %169 = vperm.xlu0 %168, %v65
    %v170 = vpop.permute.xlu0 %169
    %172 = vset.pattern.permute.xlu0 3
    %173 = vperm.xlu0 %172, %v66
    %v174 = vpop.permute.xlu0 %173
    %176 = vset.pattern.permute.xlu0 3
    %177 = vperm.xlu0 %176, %v67
    %v178 = vpop.permute.xlu0 %177
    %v180 = vlaneseq
    %v181 = vshrl.u32 %v180, 7
    %v182 = vsub.s32 3, %v181
    %v183 = vrot.slane %v59, %v182
    %v184 = vlaneseq
    %v185 = vshrl.u32 %v184, 7
    %v186 = vsub.s32 3, %v185
    %v187 = vrot.slane %v61, %v186
    %v188 = vmul.f32 %v166, %v183
    %v189 = vmul.f32 %v170, %v183
    %v190 = vmul.f32 %v174, %v187
    %v191 = vmul.f32 %v178, %v187
    %v192 = vadd.f32 %v160, %v188
    %v193 = vadd.f32 %v161, %v189
    %v194 = vadd.f32 %v162, %v190
    %v195 = vadd.f32 %v163, %v191
    %196 = vset.pattern.permute.xlu0 4
    %197 = vperm.xlu0 %196, %v64
    %v198 = vpop.permute.xlu0 %197
    %200 = vset.pattern.permute.xlu0 4
    %201 = vperm.xlu0 %200, %v65
    %v202 = vpop.permute.xlu0 %201
    %204 = vset.pattern.permute.xlu0 4
    %205 = vperm.xlu0 %204, %v66
    %v206 = vpop.permute.xlu0 %205
    %208 = vset.pattern.permute.xlu0 4
    %209 = vperm.xlu0 %208, %v67
    %v210 = vpop.permute.xlu0 %209
    %v212 = vlaneseq
    %v213 = vshrl.u32 %v212, 7
    %v214 = vsub.s32 4, %v213
    %v215 = vrot.slane %v59, %v214
    %v216 = vlaneseq
    %v217 = vshrl.u32 %v216, 7
    %v218 = vsub.s32 4, %v217
    %v219 = vrot.slane %v61, %v218
    %v220 = vmul.f32 %v198, %v215
    %v221 = vmul.f32 %v202, %v215
    %v222 = vmul.f32 %v206, %v219
    %v223 = vmul.f32 %v210, %v219
    %v224 = vadd.f32 %v192, %v220
    %v225 = vadd.f32 %v193, %v221
    %v226 = vadd.f32 %v194, %v222
    %v227 = vadd.f32 %v195, %v223
    %228 = vset.pattern.permute.xlu0 5
    %229 = vperm.xlu0 %228, %v64
    %v230 = vpop.permute.xlu0 %229
    %232 = vset.pattern.permute.xlu0 5
    %233 = vperm.xlu0 %232, %v65
    %v234 = vpop.permute.xlu0 %233
    %236 = vset.pattern.permute.xlu0 5
    %237 = vperm.xlu0 %236, %v66
    %v238 = vpop.permute.xlu0 %237
    %240 = vset.pattern.permute.xlu0 5
    %241 = vperm.xlu0 %240, %v67
    %v242 = vpop.permute.xlu0 %241
    %v244 = vlaneseq
    %v245 = vshrl.u32 %v244, 7
    %v246 = vsub.s32 5, %v245
    %v247 = vrot.slane %v59, %v246
    %v248 = vlaneseq
    %v249 = vshrl.u32 %v248, 7
    %v250 = vsub.s32 5, %v249
    %v251 = vrot.slane %v61, %v250
    %v252 = vmul.f32 %v230, %v247
    %v253 = vmul.f32 %v234, %v247
    %v254 = vmul.f32 %v238, %v251
    %v255 = vmul.f32 %v242, %v251
    %v256 = vadd.f32 %v224, %v252
    %v257 = vadd.f32 %v225, %v253
    %v258 = vadd.f32 %v226, %v254
    %v259 = vadd.f32 %v227, %v255
    %260 = vset.pattern.permute.xlu0 6
    %261 = vperm.xlu0 %260, %v64
    %v262 = vpop.permute.xlu0 %261
    %264 = vset.pattern.permute.xlu0 6
    %265 = vperm.xlu0 %264, %v65
    %v266 = vpop.permute.xlu0 %265
    %268 = vset.pattern.permute.xlu0 6
    %269 = vperm.xlu0 %268, %v66
    %v270 = vpop.permute.xlu0 %269
    %272 = vset.pattern.permute.xlu0 6
    %273 = vperm.xlu0 %272, %v67
    %v274 = vpop.permute.xlu0 %273
    %v276 = vlaneseq
    %v277 = vshrl.u32 %v276, 7
    %v278 = vsub.s32 6, %v277
    %v279 = vrot.slane %v59, %v278
    %v280 = vlaneseq
    %v281 = vshrl.u32 %v280, 7
    %v282 = vsub.s32 6, %v281
    %v283 = vrot.slane %v61, %v282
    %v284 = vmul.f32 %v262, %v279
    %v285 = vmul.f32 %v266, %v279
    %v286 = vmul.f32 %v270, %v283
    %v287 = vmul.f32 %v274, %v283
    %v288 = vadd.f32 %v256, %v284
    %v289 = vadd.f32 %v257, %v285
    %v290 = vadd.f32 %v258, %v286
    %v291 = vadd.f32 %v259, %v287
    %292 = vset.pattern.permute.xlu0 7
    %293 = vperm.xlu0 %292, %v64
    %v294 = vpop.permute.xlu0 %293
    %296 = vset.pattern.permute.xlu0 7
    %297 = vperm.xlu0 %296, %v65
    %v298 = vpop.permute.xlu0 %297
    %300 = vset.pattern.permute.xlu0 7
    %301 = vperm.xlu0 %300, %v66
    %v302 = vpop.permute.xlu0 %301
    %304 = vset.pattern.permute.xlu0 7
    %305 = vperm.xlu0 %304, %v67
    %v306 = vpop.permute.xlu0 %305
    %v308 = vlaneseq
    %v309 = vshrl.u32 %v308, 7
    %v310 = vsub.s32 7, %v309
    %v311 = vrot.slane %v59, %v310
    %v312 = vlaneseq
    %v313 = vshrl.u32 %v312, 7
    %v314 = vsub.s32 7, %v313
    %v315 = vrot.slane %v61, %v314
    %v316 = vmul.f32 %v294, %v311
    %v317 = vmul.f32 %v298, %v311
    %v318 = vmul.f32 %v302, %v315
    %v319 = vmul.f32 %v306, %v315
    %v320 = vadd.f32 %v288, %v316
    %v321 = vadd.f32 %v289, %v317
    %v322 = vadd.f32 %v290, %v318
    %v323 = vadd.f32 %v291, %v319
    %324 = vset.pattern.permute.xlu0 8
    %325 = vperm.xlu0 %324, %v64
    %v326 = vpop.permute.xlu0 %325
    %328 = vset.pattern.permute.xlu0 8
    %329 = vperm.xlu0 %328, %v65
    %v330 = vpop.permute.xlu0 %329
    %332 = vset.pattern.permute.xlu0 8
    %333 = vperm.xlu0 %332, %v66
    %v334 = vpop.permute.xlu0 %333
    %336 = vset.pattern.permute.xlu0 8
    %337 = vperm.xlu0 %336, %v67
    %v338 = vpop.permute.xlu0 %337
    %v340 = vlaneseq
    %v341 = vshrl.u32 %v340, 7
    %v342 = vsub.s32 0, %v341
    %v343 = vrot.slane %v60, %v342
    %v344 = vlaneseq
    %v345 = vshrl.u32 %v344, 7
    %v346 = vsub.s32 0, %v345
    %v347 = vrot.slane %v62, %v346
    %v348 = vmul.f32 %v326, %v343
    %v349 = vmul.f32 %v330, %v343
    %v350 = vmul.f32 %v334, %v347
    %v351 = vmul.f32 %v338, %v347
    %v352 = vadd.f32 %v320, %v348
    %v353 = vadd.f32 %v321, %v349
    %v354 = vadd.f32 %v322, %v350
    %v355 = vadd.f32 %v323, %v351
    %356 = vset.pattern.permute.xlu0 9
    %357 = vperm.xlu0 %356, %v64
    %v358 = vpop.permute.xlu0 %357
    %360 = vset.pattern.permute.xlu0 9
    %361 = vperm.xlu0 %360, %v65
    %v362 = vpop.permute.xlu0 %361
    %364 = vset.pattern.permute.xlu0 9
    %365 = vperm.xlu0 %364, %v66
    %v366 = vpop.permute.xlu0 %365
    %368 = vset.pattern.permute.xlu0 9
    %369 = vperm.xlu0 %368, %v67
    %v370 = vpop.permute.xlu0 %369
    %v372 = vlaneseq
    %v373 = vshrl.u32 %v372, 7
    %v374 = vsub.s32 1, %v373
    %v375 = vrot.slane %v60, %v374
    %v376 = vlaneseq
    %v377 = vshrl.u32 %v376, 7
    %v378 = vsub.s32 1, %v377
    %v379 = vrot.slane %v62, %v378
    %v380 = vmul.f32 %v358, %v375
    %v381 = vmul.f32 %v362, %v375
    %v382 = vmul.f32 %v366, %v379
    %v383 = vmul.f32 %v370, %v379
    %v384 = vadd.f32 %v352, %v380
    %v385 = vadd.f32 %v353, %v381
    %v386 = vadd.f32 %v354, %v382
    %v387 = vadd.f32 %v355, %v383
    %388 = vset.pattern.permute.xlu0 10
    %389 = vperm.xlu0 %388, %v64
    %v390 = vpop.permute.xlu0 %389
    %392 = vset.pattern.permute.xlu0 10
    %393 = vperm.xlu0 %392, %v65
    %v394 = vpop.permute.xlu0 %393
    %396 = vset.pattern.permute.xlu0 10
    %397 = vperm.xlu0 %396, %v66
    %v398 = vpop.permute.xlu0 %397
    %400 = vset.pattern.permute.xlu0 10
    %401 = vperm.xlu0 %400, %v67
    %v402 = vpop.permute.xlu0 %401
    %v404 = vlaneseq
    %v405 = vshrl.u32 %v404, 7
    %v406 = vsub.s32 2, %v405
    %v407 = vrot.slane %v60, %v406
    %v408 = vlaneseq
    %v409 = vshrl.u32 %v408, 7
    %v410 = vsub.s32 2, %v409
    %v411 = vrot.slane %v62, %v410
    %v412 = vmul.f32 %v390, %v407
    %v413 = vmul.f32 %v394, %v407
    %v414 = vmul.f32 %v398, %v411
    %v415 = vmul.f32 %v402, %v411
    %v416 = vadd.f32 %v384, %v412
    %v417 = vadd.f32 %v385, %v413
    %v418 = vadd.f32 %v386, %v414
    %v419 = vadd.f32 %v387, %v415
    %420 = vset.pattern.permute.xlu0 11
    %421 = vperm.xlu0 %420, %v64
    %v422 = vpop.permute.xlu0 %421
    %424 = vset.pattern.permute.xlu0 11
    %425 = vperm.xlu0 %424, %v65
    %v426 = vpop.permute.xlu0 %425
    %428 = vset.pattern.permute.xlu0 11
    %429 = vperm.xlu0 %428, %v66
    %v430 = vpop.permute.xlu0 %429
    %432 = vset.pattern.permute.xlu0 11
    %433 = vperm.xlu0 %432, %v67
    %v434 = vpop.permute.xlu0 %433
    %v436 = vlaneseq
    %v437 = vshrl.u32 %v436, 7
    %v438 = vsub.s32 3, %v437
    %v439 = vrot.slane %v60, %v438
    %v440 = vlaneseq
    %v441 = vshrl.u32 %v440, 7
    %v442 = vsub.s32 3, %v441
    %v443 = vrot.slane %v62, %v442
    %v444 = vmul.f32 %v422, %v439
    %v445 = vmul.f32 %v426, %v439
    %v446 = vmul.f32 %v430, %v443
    %v447 = vmul.f32 %v434, %v443
    %v448 = vadd.f32 %v416, %v444
    %v449 = vadd.f32 %v417, %v445
    %v450 = vadd.f32 %v418, %v446
    %v451 = vadd.f32 %v419, %v447
    %452 = vset.pattern.permute.xlu0 12
    %453 = vperm.xlu0 %452, %v64
    %v454 = vpop.permute.xlu0 %453
    %456 = vset.pattern.permute.xlu0 12
    %457 = vperm.xlu0 %456, %v65
    %v458 = vpop.permute.xlu0 %457
    %460 = vset.pattern.permute.xlu0 12
    %461 = vperm.xlu0 %460, %v66
    %v462 = vpop.permute.xlu0 %461
    %464 = vset.pattern.permute.xlu0 12
    %465 = vperm.xlu0 %464, %v67
    %v466 = vpop.permute.xlu0 %465
    %v468 = vlaneseq
    %v469 = vshrl.u32 %v468, 7
    %v470 = vsub.s32 4, %v469
    %v471 = vrot.slane %v60, %v470
    %v472 = vlaneseq
    %v473 = vshrl.u32 %v472, 7
    %v474 = vsub.s32 4, %v473
    %v475 = vrot.slane %v62, %v474
    %v476 = vmul.f32 %v454, %v471
    %v477 = vmul.f32 %v458, %v471
    %v478 = vmul.f32 %v462, %v475
    %v479 = vmul.f32 %v466, %v475
    %v480 = vadd.f32 %v448, %v476
    %v481 = vadd.f32 %v449, %v477
    %v482 = vadd.f32 %v450, %v478
    %v483 = vadd.f32 %v451, %v479
    %484 = vset.pattern.permute.xlu0 13
    %485 = vperm.xlu0 %484, %v64
    %v486 = vpop.permute.xlu0 %485
    %488 = vset.pattern.permute.xlu0 13
    %489 = vperm.xlu0 %488, %v65
    %v490 = vpop.permute.xlu0 %489
    %492 = vset.pattern.permute.xlu0 13
    %493 = vperm.xlu0 %492, %v66
    %v494 = vpop.permute.xlu0 %493
    %496 = vset.pattern.permute.xlu0 13
    %497 = vperm.xlu0 %496, %v67
    %v498 = vpop.permute.xlu0 %497
    %v500 = vlaneseq
    %v501 = vshrl.u32 %v500, 7
    %v502 = vsub.s32 5, %v501
    %v503 = vrot.slane %v60, %v502
    %v504 = vlaneseq
    %v505 = vshrl.u32 %v504, 7
    %v506 = vsub.s32 5, %v505
    %v507 = vrot.slane %v62, %v506
    %v508 = vmul.f32 %v486, %v503
    %v509 = vmul.f32 %v490, %v503
    %v510 = vmul.f32 %v494, %v507
    %v511 = vmul.f32 %v498, %v507
    %v512 = vadd.f32 %v480, %v508
    %v513 = vadd.f32 %v481, %v509
    %v514 = vadd.f32 %v482, %v510
    %v515 = vadd.f32 %v483, %v511
    %516 = vset.pattern.permute.xlu0 14
    %517 = vperm.xlu0 %516, %v64
    %v518 = vpop.permute.xlu0 %517
    %520 = vset.pattern.permute.xlu0 14
    %521 = vperm.xlu0 %520, %v65
    %v522 = vpop.permute.xlu0 %521
    %524 = vset.pattern.permute.xlu0 14
    %525 = vperm.xlu0 %524, %v66
    %v526 = vpop.permute.xlu0 %525
    %528 = vset.pattern.permute.xlu0 14
    %529 = vperm.xlu0 %528, %v67
    %v530 = vpop.permute.xlu0 %529
    %v532 = vlaneseq
    %v533 = vshrl.u32 %v532, 7
    %v534 = vsub.s32 6, %v533
    %v535 = vrot.slane %v60, %v534
    %v536 = vlaneseq
    %v537 = vshrl.u32 %v536, 7
    %v538 = vsub.s32 6, %v537
    %v539 = vrot.slane %v62, %v538
    %v540 = vmul.f32 %v518, %v535
    %v541 = vmul.f32 %v522, %v535
    %v542 = vmul.f32 %v526, %v539
    %v543 = vmul.f32 %v530, %v539
    %v544 = vadd.f32 %v512, %v540
    %v545 = vadd.f32 %v513, %v541
    %v546 = vadd.f32 %v514, %v542
    %v547 = vadd.f32 %v515, %v543
    %548 = vset.pattern.permute.xlu0 15
    %549 = vperm.xlu0 %548, %v64
    %v550 = vpop.permute.xlu0 %549
    %552 = vset.pattern.permute.xlu0 15
    %553 = vperm.xlu0 %552, %v65
    %v554 = vpop.permute.xlu0 %553
    %556 = vset.pattern.permute.xlu0 15
    %557 = vperm.xlu0 %556, %v66
    %v558 = vpop.permute.xlu0 %557
    %560 = vset.pattern.permute.xlu0 15
    %561 = vperm.xlu0 %560, %v67
    %v562 = vpop.permute.xlu0 %561
    %v564 = vlaneseq
    %v565 = vshrl.u32 %v564, 7
    %v566 = vsub.s32 7, %v565
    %v567 = vrot.slane %v60, %v566
    %v568 = vlaneseq
    %v569 = vshrl.u32 %v568, 7
    %v570 = vsub.s32 7, %v569
    %v571 = vrot.slane %v62, %v570
    %v572 = vmul.f32 %v550, %v567
    %v573 = vmul.f32 %v554, %v567
    %v574 = vmul.f32 %v558, %v571
    %v575 = vmul.f32 %v562, %v571
    %v576 = vadd.f32 %v544, %v572
    %v577 = vadd.f32 %v545, %v573
    %v578 = vadd.f32 %v546, %v574
    %v579 = vadd.f32 %v547, %v575
    %v580 = vld [vmem:[#allocation7] sm:$0xff]
    %v581 = vld [vmem:[#allocation7 + $0x8] sm:$0xff]
    %v582 = vld [vmem:[#allocation7 + $0x10] sm:$0xff]
    %v583 = vld [vmem:[#allocation7 + $0x18] sm:$0xff]
    %v585 = vlaneseq
    %v586 = vshrl.u32 %v585, 7
    %v587 = vsub.s32 0, %v586
    %v588 = vrot.slane %v63, %v587
    %vm590 = vcmask 261120
    %v592 = vsel %vm590, %v576, 0
    %v595 = vsel %vm590, %v577, 0
    %v598 = vsel %vm590, %v578, 0
    %v601 = vsel %vm590, %v579, 0
    %603 = vmatprep.subr.mxu0 0.0
    %604 = vmatpush1.msra.mxu0 0.0
    %605 = vmatprep.subr.mxu0 0.0
    %606 = vmatpush1.msra.mxu0 0.0
    %607 = vmatprep.subr.mxu0 0.0
    %608 = vmatpush1.msra.mxu0 0.0
    %609 = vmatprep.subr.mxu0 0.0
    %610 = vmatpush1.msra.mxu0 0.0
    %611 = vmatprep.subr.mxu0 0.0
    %612 = vmatpush1.msra.mxu0 0.0
    %613 = vmatprep.subr.mxu0 0.0
    %614 = vmatpush1.msra.mxu0 0.0
    %615 = vmatprep.subr.mxu0 0.0
    %616 = vmatpush1.msra.mxu0 0.0
    %617 = vmatprep.subr.mxu0 0.0
    %618 = vmatpush1.msra.mxu0 0.0
    %619 = vmatprep.subr.mxu0 0.0
    %620 = vmatpush1.msra.mxu0 0.0
    %621 = vmatprep.subr.mxu0 0.0
    %622 = vmatpush1.msra.mxu0 0.0
    %623 = vmatprep.subr.mxu0 0.0
    %624 = vmatpush1.msra.mxu0 0.0
    %625 = vmatprep.subr.mxu0 0.0
    %626 = vmatpush1.msra.mxu0 0.0
    %627 = vmatprep.subr.mxu0 0.0
    %628 = vmatpush1.msra.mxu0 %v583
    %629 = vmatprep.subr.mxu0 0.0
    %630 = vmatpush1.msra.mxu0 %v582
    %631 = vmatprep.subr.mxu0 0.0
    %632 = vmatpush1.msra.mxu0 %v581
    %633 = vmatprep.subr.mxu0 0.0
    %634 = vmatpush1.msra.mxu0 %v580
    %635 = vmatprep.subr.mxu0 0.0
    %636 = vmatpush2.msra.mxu0 0.0
    %637 = vmatprep.subr.mxu0 0.0
    %638 = vmatpush2.msra.mxu0 0.0
    %639 = vmatprep.subr.mxu0 0.0
    %640 = vmatpush2.msra.mxu0 0.0
    %641 = vmatprep.subr.mxu0 0.0
    %642 = vmatpush2.msra.mxu0 0.0
    %643 = vmatprep.subr.mxu0 0.0
    %644 = vmatpush2.msra.mxu0 0.0
    %645 = vmatprep.subr.mxu0 0.0
    %646 = vmatpush2.msra.mxu0 0.0
    %647 = vmatprep.subr.mxu0 0.0
    %648 = vmatpush2.msra.mxu0 0.0
    %649 = vmatprep.subr.mxu0 0.0
    %650 = vmatpush2.msra.mxu0 0.0
    %651 = vmatprep.subr.mxu0 0.0
    %652 = vmatpush2.msra.mxu0 0.0
    %653 = vmatprep.subr.mxu0 0.0
    %654 = vmatpush2.msra.mxu0 0.0
    %655 = vmatprep.subr.mxu0 0.0
    %656 = vmatpush2.msra.mxu0 0.0
    %657 = vmatprep.subr.mxu0 0.0
    %658 = vmatpush2.msra.mxu0 0.0
    %659 = vmatprep.subr.mxu0 0.0
    %660 = vmatpush2.msra.mxu0 0.0
    %661 = vmatprep.subr.mxu0 0.0
    %662 = vmatpush2.msra.mxu0 0.0
    %663 = vmatprep.subr.mxu0 0.0
    %664 = vmatpush2.msra.mxu0 0.0
    %665 = vmatprep.subr.mxu0 0.0
    %666 = vmatpush2.msra.mxu0 0.0
    %667 = vmatprep.mubr.f32.mxu0 0.0
    %668 = vmatmul.mubr.f32.gmra.mxu0 %v592
    %v669 = vpop.f32.mrf.mxu0
    %v670 = vadd.f32 %v588, %v669
    %v671 = vpop.f32.mrf.mxu0
    %672 = vmatprep.mubr.f32.mxu0 0.0
    %673 = vmatmul.mubr.f32.gmra.mxu0 %v595
    %v674 = vpop.f32.mrf.mxu0
    %v675 = vadd.f32 %v588, %v674
    %v676 = vpop.f32.mrf.mxu0
    %677 = vmatprep.mubr.f32.mxu0 0.0
    %678 = vmatmul.mubr.f32.gmra.mxu0 %v598
    %v679 = vpop.f32.mrf.mxu0
    %v680 = vadd.f32 %v588, %v679
    %v681 = vpop.f32.mrf.mxu0
    %682 = vmatprep.mubr.f32.mxu0 0.0
    %683 = vmatmul.mubr.f32.gmra.mxu0 %v601
    %v684 = vpop.f32.mrf.mxu0
    %v685 = vadd.f32 %v588, %v684
    %v686 = vpop.f32.mrf.mxu0
    %687 = vdwg.mxu0
    %v688 = vmax.f32 %v670, 0.0
    %v689 = vmax.f32 %v675, 0.0
    %v690 = vmax.f32 %v680, 0.0
    %v691 = vmax.f32 %v685, 0.0
    %v692 = vadd.f32 %v59, %v688
    %v693 = vadd.f32 %v60, %v689
    %v694 = vadd.f32 %v61, %v690
    %v695 = vadd.f32 %v62, %v691
    %v696 = vsel %vm590, %v692, 0.0
    %v697 = vsel %vm590, %v693, 0.0
    %v698 = vadd.f32 %v696, %v697
    %v699 = vrot.slane %v698, 4
    %v700 = vadd.f32 %v698, %v699
    %v701 = vrot.slane %v700, 2
    %v702 = vadd.f32 %v700, %v701
    %v703 = vrot.slane %v702, 1
    %v704 = vadd.f32 %v702, %v703
    %v705 = vsel %vm590, %v694, 0.0
    %v706 = vsel %vm590, %v695, 0.0
    %v707 = vadd.f32 %v705, %v706
    %v708 = vrot.slane %v707, 4
    %v709 = vadd.f32 %v707, %v708
    %v710 = vrot.slane %v709, 2
    %v711 = vadd.f32 %v709, %v710
    %v712 = vrot.slane %v711, 1
    %v713 = vadd.f32 %v711, %v712
    %v714 = vrcp.pop 16.0
    %v715 = vmul.f32 %v704, %v714
    %v716 = vmul.f32 %v713, %v714
    %v717 = vmul.f32 %v692, %v692
    %v718 = vmul.f32 %v693, %v693
    %v719 = vmul.f32 %v694, %v694
    %v720 = vmul.f32 %v695, %v695
    %v721 = vsel %vm590, %v717, 0.0
    %v722 = vsel %vm590, %v718, 0.0
    %v723 = vadd.f32 %v721, %v722
    %v724 = vrot.slane %v723, 4
    %v725 = vadd.f32 %v723, %v724
    %v726 = vrot.slane %v725, 2
    %v727 = vadd.f32 %v725, %v726
    %v728 = vrot.slane %v727, 1
    %v729 = vadd.f32 %v727, %v728
    %v730 = vsel %vm590, %v719, 0.0
    %v731 = vsel %vm590, %v720, 0.0
    %v732 = vadd.f32 %v730, %v731
    %v733 = vrot.slane %v732, 4
    %v734 = vadd.f32 %v732, %v733
    %v735 = vrot.slane %v734, 2
    %v736 = vadd.f32 %v734, %v735
    %v737 = vrot.slane %v736, 1
    %v738 = vadd.f32 %v736, %v737
    %v739 = vmul.f32 %v729, %v714
    %v740 = vmul.f32 %v738, %v714
    %v741 = vmul.f32 %v715, %v715
    %v742 = vmul.f32 %v716, %v716
    %v743 = vsub.f32 %v739, %v741
    %v744 = vsub.f32 %v740, %v742
    %v745 = vmax.f32 %v743, 0.0
    %v746 = vmax.f32 %v744, 0.0
    %v747 = vsub.f32 %v692, %v715
    %v748 = vsub.f32 %v693, %v715
    %v749 = vsub.f32 %v694, %v716
    %v750 = vsub.f32 %v695, %v716
    %v751 = vadd.f32 %v745, 1e-05
    %v752 = vadd.f32 %v746, 1e-05
    %v753 = vrsqrt.pop %v751
    %v754 = vrsqrt.pop %v752
    %v755 = vmul.f32 %v747, %v753
    %v756 = vmul.f32 %v748, %v753
    %v757 = vmul.f32 %v749, %v754
    %v758 = vmul.f32 %v750, %v754
    %759 = vst.msk [vmem:[#allocation8] sm:$0xff] %vm590, %v755
    %760 = vst.msk [vmem:[#allocation8 + $0x8] sm:$0xff] %vm590, %v756
    %761 = vst.msk [vmem:[#allocation8 + $0x10] sm:$0xff] %vm590, %v757
    %762 = vst.msk [vmem:[#allocation8 + $0x18] sm:$0xff] %vm590, %v758
    // Predicated region
    $region30: #{tpu_custom_call.1} parent=1 // pred_check
      _
    $region31: #{tpu_custom_call.1} parent=1 // pred_check_branch
      %764 = sbr.rel (0) target = $region33
    $region32: #{tpu_custom_call.1} parent=1 // pred_region
      %s766 = ssub.s32 512, 512
      %767 = vsyncadd [#allocation4], %s766
      %s768 = sshll.u32 [#allocation8], 4
      %s769 = int_to_ptr.vmem [resolvable:$true] %s768
      %774 = dma.vmem_to_hbm [thread:$0]  %s769, 512, %s4, [#allocation4], 128, 128, 8
    $region33: #{tpu_custom_call.1} parent=1 // pred_fallthru
      _
    // Predicated region
    $region34: #{tpu_custom_call.1} parent=1 // pred_check
      _
    $region35: #{tpu_custom_call.1} parent=1 // pred_check_branch
      %776 = sbr.rel (0) target = $region37
    $region36: #{tpu_custom_call.1} parent=1 // pred_region
      %777 = dma.done [#allocation4], 512
    $region37: #{tpu_custom_call.1} parent=1 // pred_fallthru
      _
    %778 = vsyncpa [#allocation3], 1
    %779 = vsyncpa [#allocation6], 1
    %780 = vsyncpa [#allocation4], 1

</llo_original>
